<compile_context>
chip_gen: v7x
topology: tpu7x:2x2x1
jax: 0.10.0
libtpu: 0.0.40
codegen_flags: <defaults>
</compile_context>

<pallas_src>
import jax
import jax.numpy as jnp
from jax.experimental import pallas as pl
from jax.experimental.pallas import tpu as pltpu

HIDDEN = 128


def critic_kernel(xT_ref, w1T_ref, b1_ref, w2T_ref, b2_ref, w3_ref, b3_ref, o_ref):
    # xT : (F, TB)    w1T: (H, F)   b1: (H, 1)
    # w2T: (H, H)     b2 : (H, 1)   w3: (H, 1)   b3: (1,) in SMEM
    h1 = jnp.tanh(
        jnp.dot(w1T_ref[...], xT_ref[...], preferred_element_type=jnp.float32)
        + b1_ref[...]
    )  # (H, TB)
    h2 = jnp.tanh(
        jnp.dot(w2T_ref[...], h1, preferred_element_type=jnp.float32)
        + b2_ref[...]
    )  # (H, TB)
    # Final 128 -> 1 projection: multiply by the w3 column (VALU) and reduce
    # over the sublane/feature axis (XLU) -> lane-dense (1, TB) row.  This
    # keeps the last-layer work off the MXU and the output store unmasked.
    v = jnp.sum(h2 * w3_ref[...], axis=0, keepdims=True) + b3_ref[0]
    o_ref[...] = v.astype(o_ref.dtype)


def _round_up(a, m):
    return (a + m - 1) // m * m


def _pick_tile(B, tile_b):
    """Batch tile (multiple of 128).  Splits a lone tile across two cores only
    when that does not increase the padded batch."""
    tile_b = max(128, _round_up(int(tile_b), 128))
    b128 = _round_up(B, 128)
    tb = min(tile_b, b128)
    n_tiles = _round_up(B, tb) // tb
    if n_tiles < 2 and b128 >= 256 and (b128 % 256) == 0:
        tb = b128 // 2  # still a multiple of 128, no extra padding
    return tb, _round_up(B, tb)


def critic_forward(x, params, *, tile_b=512):
    """x: (B, F) float32 -> (B,) float32 (matches Critic.forward + squeeze(-1))."""
    w1T, b1, w2T, b2, w3, b3 = params
    B, F = x.shape
    H = w1T.shape[0]

    tb, B_pad = _pick_tile(B, tile_b)

    # Go feature-major (batch on lanes), then pad the lane axis to a tile
    # multiple.  This is the only wrapper-side data movement.
    xT = x.T  # (F, B)
    if B_pad != B:
        xT = jnp.pad(xT, ((0, 0), (0, B_pad - B)))

    out = pl.pallas_call(
        critic_kernel,
        out_shape=jax.ShapeDtypeStruct((1, B_pad), jnp.float32),
        grid_spec=pltpu.PrefetchScalarGridSpec(
            num_scalar_prefetch=0,
            grid=(B_pad // tb,),
            in_specs=[
                pl.BlockSpec((F, tb), lambda i: (0, i)),            # xT tile
                pl.BlockSpec((H, F), lambda i: (0, 0)),             # W1^T (resident)
                pl.BlockSpec((H, 1), lambda i: (0, 0)),             # b1 column
                pl.BlockSpec((H, H), lambda i: (0, 0)),             # W2^T (resident)
                pl.BlockSpec((H, 1), lambda i: (0, 0)),             # b2 column
                pl.BlockSpec((H, 1), lambda i: (0, 0)),             # w3 column
                pl.BlockSpec(memory_space=pltpu.MemorySpace.SMEM),  # b3 scalar
            ],
            out_specs=pl.BlockSpec((1, tb), lambda i: (0, i)),      # lane-dense row
        ),
        compiler_params=pltpu.CompilerParams(
            dimension_semantics=("parallel",),
            vmem_limit_bytes=32 * 1024 * 1024,
        ),
    )(xT, w1T, b1, w2T, b2, w3, b3)

    # matches PyTorch's values.squeeze(-1)
    return out[0, :B]


def init_params(key, num_features):
    """Deterministic init matching nn.Linear default (uniform +/- 1/sqrt(fan_in)).

    Weights are stored in the kernel's layout:
      W1^T: (H, F)  [same as PyTorch's (out, in)],  b1: (H, 1)
      W2^T: (H, H),                                 b2: (H, 1)
      w3:   (H, 1)  [PyTorch (1, H) transposed],    b3: (1,)
    """
    ks = jax.random.split(key, 6)

    def unif(k, shape, fan_in):
        bound = 1.0 / jnp.sqrt(float(fan_in))
        return jax.random.uniform(k, shape, jnp.float32, -bound, bound)

    w1T = unif(ks[0], (HIDDEN, num_features), num_features)
    b1 = unif(ks[1], (HIDDEN, 1), num_features)
    w2T = unif(ks[2], (HIDDEN, HIDDEN), HIDDEN)
    b2 = unif(ks[3], (HIDDEN, 1), HIDDEN)
    w3 = unif(ks[4], (HIDDEN, 1), HIDDEN)
    b3 = unif(ks[5], (1,), HIDDEN)
    return (w1T, b1, w2T, b2, w3, b3)


def critic_reference(x, params):
    w1T, b1, w2T, b2, w3, b3 = params
    hp = jax.lax.Precision.HIGHEST
    h1 = jnp.tanh(jnp.dot(x, w1T.T, precision=hp) + b1[:, 0])
    h2 = jnp.tanh(jnp.dot(h1, w2T.T, precision=hp) + b2[:, 0])
    v = jnp.dot(h2, w3, precision=hp) + b3
    return v[:, 0]


if __name__ == "__main__":
    key = jax.random.PRNGKey(0)
    k_param, k_x = jax.random.split(key)

    num_features = 32
    batch = 8

    params = init_params(k_param, num_features)
    x = jax.random.normal(k_x, (batch, num_features), jnp.float32)

    values = jax.block_until_ready(critic_forward(x, params))
    ref = critic_reference(x, params)
    assert values.shape == (batch,)
    assert jnp.allclose(values, ref, atol=1e-4, rtol=1e-4)

    # Second check: batch not a multiple of the tile -> exercises padding and
    # multiple grid steps.
    batch2 = 300
    x2 = jax.random.normal(jax.random.PRNGKey(1), (batch2, num_features), jnp.float32)
    values2 = jax.block_until_ready(critic_forward(x2, params, tile_b=128))
    ref2 = critic_reference(x2, params)
    assert values2.shape == (batch2,)
    assert jnp.allclose(values2, ref2, atol=1e-4, rtol=1e-4)

    # Third check: single-tile batch that splits evenly across two cores
    # (exercises the lone-tile split path without extra padding).
    batch3 = 256
    x3 = jax.random.normal(jax.random.PRNGKey(2), (batch3, num_features), jnp.float32)
    values3 = jax.block_until_ready(critic_forward(x3, params))
    ref3 = critic_reference(x3, params)
    assert values3.shape == (batch3,)
    assert jnp.allclose(values3, ref3, atol=1e-4, rtol=1e-4)

    print("KERNEL_OK")
</pallas_src>

<mosaic_0001>
module attributes {stable_mosaic.version = 11 : i64} {
  func.func @critic_kernel(%arg0: i32, %arg1: memref<32x128xf32, #tpu.memory_space<vmem>>, %arg2: memref<128x32xf32, #tpu.memory_space<vmem>>, %arg3: memref<128x1xf32, #tpu.memory_space<vmem>>, %arg4: memref<128x128xf32, #tpu.memory_space<vmem>>, %arg5: memref<128x1xf32, #tpu.memory_space<vmem>>, %arg6: memref<128x1xf32, #tpu.memory_space<vmem>>, %arg7: memref<1xf32, #tpu.memory_space<smem>>, %arg8: memref<1x128xf32, #tpu.memory_space<vmem>>) attributes {dimension_semantics = [#tpu.dimension_semantics<parallel>], iteration_bounds = array<i64: 1>, scalar_prefetch = 0 : i64, scratch_operands = 0 : i64, tpu.core_type = #tpu.core_type<tc>, window_params = [{transform_indices = @transform_0, window_bounds = array<i64: 32, 128>}, {pipeline_mode = #tpu.pipeline_mode<synchronous>, transform_indices = @transform_1, window_bounds = array<i64: 128, 32>}, {pipeline_mode = #tpu.pipeline_mode<synchronous>, transform_indices = @transform_2, window_bounds = array<i64: 128, 1>}, {pipeline_mode = #tpu.pipeline_mode<synchronous>, transform_indices = @transform_3, window_bounds = array<i64: 128, 128>}, {pipeline_mode = #tpu.pipeline_mode<synchronous>, transform_indices = @transform_4, window_bounds = array<i64: 128, 1>}, {pipeline_mode = #tpu.pipeline_mode<synchronous>, transform_indices = @transform_5, window_bounds = array<i64: 128, 1>}, {transform_indices = @transform_6, window_bounds = array<i64: 1>}, {transform_indices = @transform_7, window_bounds = array<i64: 1, 128>}]} {
    %c0 = arith.constant 0 : index
    %c0_0 = arith.constant 0 : index
    %0 = vector.load %arg2[%c0, %c0_0] : memref<128x32xf32, #tpu.memory_space<vmem>>, vector<128x32xf32>
    %c0_1 = arith.constant 0 : index
    %c0_2 = arith.constant 0 : index
    %1 = vector.load %arg1[%c0_1, %c0_2] : memref<32x128xf32, #tpu.memory_space<vmem>>, vector<32x128xf32>
    %cst = arith.constant dense<0.000000e+00> : vector<128x128xf32>
    %2 = tpu.matmul %0, %1, %cst {dimension_numbers = #tpu.dot_dimension_numbers<[1], [0], [0], [1], [0, 0, 1, 1], [], []>} : vector<128x32xf32>, vector<32x128xf32>, vector<128x128xf32> -> vector<128x128xf32>
    %c0_3 = arith.constant 0 : index
    %c0_4 = arith.constant 0 : index
    %3 = vector.load %arg3[%c0_3, %c0_4] : memref<128x1xf32, #tpu.memory_space<vmem>>, vector<128x1xf32>
    %4 = vector.broadcast %3 : vector<128x1xf32> to vector<128x128xf32>
    %5 = arith.addf %2, %4 : vector<128x128xf32>
    %6 = math.tanh %5 : vector<128x128xf32>
    %c0_5 = arith.constant 0 : index
    %c0_6 = arith.constant 0 : index
    %7 = vector.load %arg4[%c0_5, %c0_6] : memref<128x128xf32, #tpu.memory_space<vmem>>, vector<128x128xf32>
    %cst_7 = arith.constant dense<0.000000e+00> : vector<128x128xf32>
    %8 = tpu.matmul %7, %6, %cst_7 {dimension_numbers = #tpu.dot_dimension_numbers<[1], [0], [0], [1], [0, 0, 1, 1], [], []>} : vector<128x128xf32>, vector<128x128xf32>, vector<128x128xf32> -> vector<128x128xf32>
    %c0_8 = arith.constant 0 : index
    %c0_9 = arith.constant 0 : index
    %9 = vector.load %arg5[%c0_8, %c0_9] : memref<128x1xf32, #tpu.memory_space<vmem>>, vector<128x1xf32>
    %10 = vector.broadcast %9 : vector<128x1xf32> to vector<128x128xf32>
    %11 = arith.addf %8, %10 : vector<128x128xf32>
    %12 = math.tanh %11 : vector<128x128xf32>
    %c0_10 = arith.constant 0 : index
    %c0_11 = arith.constant 0 : index
    %13 = vector.load %arg6[%c0_10, %c0_11] : memref<128x1xf32, #tpu.memory_space<vmem>>, vector<128x1xf32>
    %14 = vector.broadcast %13 : vector<128x1xf32> to vector<128x128xf32>
    %15 = arith.mulf %12, %14 : vector<128x128xf32>
    %cst_12 = arith.constant dense<0.000000e+00> : vector<128xf32>
    %16 = vector.multi_reduction <add>, %15, %cst_12 [0] : vector<128x128xf32> to vector<128xf32>
    %17 = vector.shape_cast %16 : vector<128xf32> to vector<1x128xf32>
    %c0_13 = arith.constant 0 : index
    %18 = memref.load %arg7[%c0_13] : memref<1xf32, #tpu.memory_space<smem>>
    %19 = vector.broadcast %18 : f32 to vector<1x128xf32>
    %20 = arith.addf %17, %19 : vector<1x128xf32>
    %c0_14 = arith.constant 0 : index
    %c0_15 = arith.constant 0 : index
    %21 = vector.load %arg8[%c0_14, %c0_15] : memref<1x128xf32, #tpu.memory_space<vmem>>, vector<1x128xf32>
    tpu.vector_store %arg8[%c0_14, %c0_15], %20 {strides = array<i32>} : memref<1x128xf32, #tpu.memory_space<vmem>>, vector<1x128xf32>,
    return
  }
  func.func @transform_0(%arg0: i32) -> (i32, i32) {
    %c0_i32 = arith.constant 0 : i32
    %c0_i32_0 = arith.constant 0 : i32
    return %c0_i32, %arg0 : i32, i32
  }
  func.func @transform_1(%arg0: i32) -> (i32, i32) {
    %c0_i32 = arith.constant 0 : i32
    %c0_i32_0 = arith.constant 0 : i32
    %c0_i32_1 = arith.constant 0 : i32
    return %c0_i32, %c0_i32_0 : i32, i32
  }
  func.func @transform_2(%arg0: i32) -> (i32, i32) {
    %c0_i32 = arith.constant 0 : i32
    %c0_i32_0 = arith.constant 0 : i32
    %c0_i32_1 = arith.constant 0 : i32
    return %c0_i32, %c0_i32_0 : i32, i32
  }
  func.func @transform_3(%arg0: i32) -> (i32, i32) {
    %c0_i32 = arith.constant 0 : i32
    %c0_i32_0 = arith.constant 0 : i32
    %c0_i32_1 = arith.constant 0 : i32
    return %c0_i32, %c0_i32_0 : i32, i32
  }
  func.func @transform_4(%arg0: i32) -> (i32, i32) {
    %c0_i32 = arith.constant 0 : i32
    %c0_i32_0 = arith.constant 0 : i32
    %c0_i32_1 = arith.constant 0 : i32
    return %c0_i32, %c0_i32_0 : i32, i32
  }
  func.func @transform_5(%arg0: i32) -> (i32, i32) {
    %c0_i32 = arith.constant 0 : i32
    %c0_i32_0 = arith.constant 0 : i32
    %c0_i32_1 = arith.constant 0 : i32
    return %c0_i32, %c0_i32_0 : i32, i32
  }
  func.func @transform_6(%arg0: i32) -> i32 {
    %c0_i32 = arith.constant 0 : i32
    %c0_i32_0 = arith.constant 0 : i32
    return %c0_i32 : i32
  }
  func.func @transform_7(%arg0: i32) -> (i32, i32) {
    %c0_i32 = arith.constant 0 : i32
    %c0_i32_0 = arith.constant 0 : i32
    return %c0_i32, %arg0 : i32, i32
  }
}

</mosaic_0001>

<llo_original>
// kernel: tpu_custom_call.1
$region0: #{tpu_custom_call.1}
  #allocation0 [shape = 'u32[]', space=smem, size = 0x4, offset = 0x4, fixed_abs, tag = 'smem constant byte address 0x4 - core index']
  #allocation1 [shape = 'u32[144,128]{1,0:T(1,128)}', space=vmem, size = 0x12000, scoped, tag = 'internal scratch']
  #allocation2 [shape = 'f32[1]{0:T(128)S(6)}', space=smem, size = 0x200, scoped, tag = 'scoped memory for tpu_custom_call.1']
  %s0 = inlined_call_operand.vmem [shape: f32[32,128], index: 0, kind: input, shape index: {}]
  %s1 = inlined_call_operand.vmem [shape: f32[128,32], index: 1, kind: input, shape index: {}]
  %s2 = inlined_call_operand.vmem [shape: f32[128,1], index: 2, kind: input, shape index: {}]
  %s3 = inlined_call_operand.vmem [shape: f32[128,128], index: 3, kind: input, shape index: {}]
  %s4 = inlined_call_operand.vmem [shape: f32[128,1], index: 4, kind: input, shape index: {}]
  %s5 = inlined_call_operand.vmem [shape: f32[128,1], index: 5, kind: input, shape index: {}]
  %s6 = inlined_call_operand.<no memory space> [shape: f32[1], index: 6, kind: input, shape index: {}]
  %s7 = inlined_call_operand.hbm [shape: f32[1,128], index: 7, kind: output, shape index: {}]
  %s8 = sld [smem:[#allocation0]]
  $region38: #{tpu_custom_call.1} parent=0
    _
  %s10 = ssub.s32 1, %s8
  %s11 = scalar_select 0, %s10, %s8
  %12 = sst [smem:[#allocation2]] %s6
  $region1: #{tpu_custom_call.1} parent=0
    #allocation3 [shape = 'u8[512]{0}', space=vmem, size = 0x400, scoped, tag = 'output window, operand 0, single buffered']
    #allocation4 [shape = 's32[1]{0}', space=sflag, size = 0x4, scoped, tag = 'scoped memory for tpu_custom_call.1']
    %13 = vsyncpa [#allocation4], 0
    // Predicated region
    $region2: #{tpu_custom_call.1} parent=1 // pred_check
      _
    $region3: #{tpu_custom_call.1} parent=1 // pred_check_branch
      %15 = sbr.rel (0) target = $region5
    $region4: #{tpu_custom_call.1} parent=1 // pred_region
      _
    $region5: #{tpu_custom_call.1} parent=1 // pred_fallthru
      _
    // Predicated region
    $region6: #{tpu_custom_call.1} parent=1 // pred_check
      _
    $region7: #{tpu_custom_call.1} parent=1 // pred_check_branch
      %17 = sbr.rel (0) target = $region9
    $region8: #{tpu_custom_call.1} parent=1 // pred_region
      _
    $region9: #{tpu_custom_call.1} parent=1 // pred_fallthru
      _
    // Predicated region
    $region10: #{tpu_custom_call.1} parent=1 // pred_check
      _
    $region11: #{tpu_custom_call.1} parent=1 // pred_check_branch
      %19 = sbr.rel (0) target = $region13
    $region12: #{tpu_custom_call.1} parent=1 // pred_region
      _
    $region13: #{tpu_custom_call.1} parent=1 // pred_fallthru
      _
    // Predicated region
    $region14: #{tpu_custom_call.1} parent=1 // pred_check
      _
    $region15: #{tpu_custom_call.1} parent=1 // pred_check_branch
      %21 = sbr.rel (0) target = $region17
    $region16: #{tpu_custom_call.1} parent=1 // pred_region
      _
    $region17: #{tpu_custom_call.1} parent=1 // pred_fallthru
      _
    // Predicated region
    $region18: #{tpu_custom_call.1} parent=1 // pred_check
      _
    $region19: #{tpu_custom_call.1} parent=1 // pred_check_branch
      %23 = sbr.rel (0) target = $region21
    $region20: #{tpu_custom_call.1} parent=1 // pred_region
      _
    $region21: #{tpu_custom_call.1} parent=1 // pred_fallthru
      _
    // Predicated region
    $region22: #{tpu_custom_call.1} parent=1 // pred_check
      _
    $region23: #{tpu_custom_call.1} parent=1 // pred_check_branch
      %25 = sbr.rel (0) target = $region25
    $region24: #{tpu_custom_call.1} parent=1 // pred_region
      _
    $region25: #{tpu_custom_call.1} parent=1 // pred_fallthru
      _
    // Predicated region
    $region26: #{tpu_custom_call.1} parent=1 // pred_check
      _
    $region27: #{tpu_custom_call.1} parent=1 // pred_check_branch
      %27 = sbr.rel (0) target = $region29
    $region28: #{tpu_custom_call.1} parent=1 // pred_region
      _
    $region29: #{tpu_custom_call.1} parent=1 // pred_fallthru
      _
    %v28 = vld [vmem:[%s1] sm:$0xff]
    %v29 = vld [vmem:[%s1 + $0x8] sm:$0xff]
    %v30 = vld [vmem:[%s1 + $0x10] sm:$0xff]
    %v31 = vld [vmem:[%s1 + $0x18] sm:$0xff]
    %v32 = vld [vmem:[%s1 + $0x20] sm:$0xff]
    %v33 = vld [vmem:[%s1 + $0x28] sm:$0xff]
    %v34 = vld [vmem:[%s1 + $0x30] sm:$0xff]
    %v35 = vld [vmem:[%s1 + $0x38] sm:$0xff]
    %v36 = vld [vmem:[%s1 + $0x40] sm:$0xff]
    %v37 = vld [vmem:[%s1 + $0x48] sm:$0xff]
    %v38 = vld [vmem:[%s1 + $0x50] sm:$0xff]
    %v39 = vld [vmem:[%s1 + $0x58] sm:$0xff]
    %v40 = vld [vmem:[%s1 + $0x60] sm:$0xff]
    %v41 = vld [vmem:[%s1 + $0x68] sm:$0xff]
    %v42 = vld [vmem:[%s1 + $0x70] sm:$0xff]
    %v43 = vld [vmem:[%s1 + $0x78] sm:$0xff]
    %v44 = vld [vmem:[%s0] sm:$0xff]
    %v45 = vld [vmem:[%s0 + $0x8] sm:$0xff]
    %v46 = vld [vmem:[%s0 + $0x10] sm:$0xff]
    %v47 = vld [vmem:[%s0 + $0x18] sm:$0xff]
    %v48 = vld [vmem:[%s2] sm:$0xff]
    %v49 = vld [vmem:[%s2 + $0x8] sm:$0xff]
    %v50 = vld [vmem:[%s2 + $0x10] sm:$0xff]
    %v51 = vld [vmem:[%s2 + $0x18] sm:$0xff]
    %v52 = vld [vmem:[%s2 + $0x20] sm:$0xff]
    %v53 = vld [vmem:[%s2 + $0x28] sm:$0xff]
    %v54 = vld [vmem:[%s2 + $0x30] sm:$0xff]
    %v55 = vld [vmem:[%s2 + $0x38] sm:$0xff]
    %v56 = vld [vmem:[%s2 + $0x40] sm:$0xff]
    %v57 = vld [vmem:[%s2 + $0x48] sm:$0xff]
    %v58 = vld [vmem:[%s2 + $0x50] sm:$0xff]
    %v59 = vld [vmem:[%s2 + $0x58] sm:$0xff]
    %v60 = vld [vmem:[%s2 + $0x60] sm:$0xff]
    %v61 = vld [vmem:[%s2 + $0x68] sm:$0xff]
    %v62 = vld [vmem:[%s2 + $0x70] sm:$0xff]
    %v63 = vld [vmem:[%s2 + $0x78] sm:$0xff]
    %65 = vset.pattern.permute.xlu0 0
    %66 = vperm.xlu0 %65, %v48
    %v67 = vpop.permute.xlu0 %66
    %70 = vset.pattern.permute.xlu0 0
    %71 = vperm.xlu0 %70, %v49
    %v72 = vpop.permute.xlu0 %71
    %75 = vset.pattern.permute.xlu0 0
    %76 = vperm.xlu0 %75, %v50
    %v77 = vpop.permute.xlu0 %76
    %80 = vset.pattern.permute.xlu0 0
    %81 = vperm.xlu0 %80, %v51
    %v82 = vpop.permute.xlu0 %81
    %85 = vset.pattern.permute.xlu0 0
    %86 = vperm.xlu0 %85, %v52
    %v87 = vpop.permute.xlu0 %86
    %90 = vset.pattern.permute.xlu0 0
    %91 = vperm.xlu0 %90, %v53
    %v92 = vpop.permute.xlu0 %91
    %95 = vset.pattern.permute.xlu0 0
    %96 = vperm.xlu0 %95, %v54
    %v97 = vpop.permute.xlu0 %96
    %100 = vset.pattern.permute.xlu0 0
    %101 = vperm.xlu0 %100, %v55
    %v102 = vpop.permute.xlu0 %101
    %105 = vset.pattern.permute.xlu0 0
    %106 = vperm.xlu0 %105, %v56
    %v107 = vpop.permute.xlu0 %106
    %110 = vset.pattern.permute.xlu0 0
    %111 = vperm.xlu0 %110, %v57
    %v112 = vpop.permute.xlu0 %111
    %115 = vset.pattern.permute.xlu0 0
    %116 = vperm.xlu0 %115, %v58
    %v117 = vpop.permute.xlu0 %116
    %120 = vset.pattern.permute.xlu0 0
    %121 = vperm.xlu0 %120, %v59
    %v122 = vpop.permute.xlu0 %121
    %125 = vset.pattern.permute.xlu0 0
    %126 = vperm.xlu0 %125, %v60
    %v127 = vpop.permute.xlu0 %126
    %130 = vset.pattern.permute.xlu0 0
    %131 = vperm.xlu0 %130, %v61
    %v132 = vpop.permute.xlu0 %131
    %135 = vset.pattern.permute.xlu0 0
    %136 = vperm.xlu0 %135, %v62
    %v137 = vpop.permute.xlu0 %136
    %140 = vset.pattern.permute.xlu0 0
    %141 = vperm.xlu0 %140, %v63
    %v142 = vpop.permute.xlu0 %141
    %vm144 = vcmask 261120
    %v146 = vsel %vm144, %v28, 0
    %v149 = vsel %vm144, %v29, 0
    %v152 = vsel %vm144, %v30, 0
    %v155 = vsel %vm144, %v31, 0
    %v158 = vsel %vm144, %v32, 0
    %v161 = vsel %vm144, %v33, 0
    %v164 = vsel %vm144, %v34, 0
    %v167 = vsel %vm144, %v35, 0
    %v170 = vsel %vm144, %v36, 0
    %v173 = vsel %vm144, %v37, 0
    %v176 = vsel %vm144, %v38, 0
    %v179 = vsel %vm144, %v39, 0
    %v182 = vsel %vm144, %v40, 0
    %v185 = vsel %vm144, %v41, 0
    %v188 = vsel %vm144, %v42, 0
    %v191 = vsel %vm144, %v43, 0
    %193 = vmatprep.subr.mxu0 0.0
    %194 = vmatpush1.msra.mxu0 %v44
    %195 = vmatprep.subr.mxu0 0.0
    %196 = vmatpush1.msra.mxu0 %v45
    %197 = vmatprep.subr.mxu0 0.0
    %198 = vmatpush1.msra.mxu0 %v46
    %199 = vmatprep.subr.mxu0 0.0
    %200 = vmatpush1.msra.mxu0 %v47
    %201 = vmatprep.subr.mxu0 0.0
    %202 = vmatpush1.msra.mxu0 0.0
    %203 = vmatprep.subr.mxu0 0.0
    %204 = vmatpush1.msra.mxu0 0.0
    %205 = vmatprep.subr.mxu0 0.0
    %206 = vmatpush1.msra.mxu0 0.0
    %207 = vmatprep.subr.mxu0 0.0
    %208 = vmatpush1.msra.mxu0 0.0
    %209 = vmatprep.subr.mxu0 0.0
    %210 = vmatpush1.msra.mxu0 0.0
    %211 = vmatprep.subr.mxu0 0.0
    %212 = vmatpush1.msra.mxu0 0.0
    %213 = vmatprep.subr.mxu0 0.0
    %214 = vmatpush1.msra.mxu0 0.0
    %215 = vmatprep.subr.mxu0 0.0
    %216 = vmatpush1.msra.mxu0 0.0
    %217 = vmatprep.subr.mxu0 0.0
    %218 = vmatpush1.msra.mxu0 0.0
    %219 = vmatprep.subr.mxu0 0.0
    %220 = vmatpush1.msra.mxu0 0.0
    %221 = vmatprep.subr.mxu0 0.0
    %222 = vmatpush1.msra.mxu0 0.0
    %223 = vmatprep.subr.mxu0 0.0
    %224 = vmatpush1.msra.mxu0 0.0
    %225 = vmatprep.subr.mxu0 0.0
    %226 = vmatpush1.msra.mxu0 0.0
    %227 = vmatprep.subr.mxu0 0.0
    %228 = vmatpush1.msra.mxu0 0.0
    %229 = vmatprep.subr.mxu0 0.0
    %230 = vmatpush1.msra.mxu0 0.0
    %231 = vmatprep.subr.mxu0 0.0
    %232 = vmatpush1.msra.mxu0 0.0
    %233 = vmatprep.subr.mxu0 0.0
    %234 = vmatpush1.msra.mxu0 0.0
    %235 = vmatprep.subr.mxu0 0.0
    %236 = vmatpush1.msra.mxu0 0.0
    %237 = vmatprep.subr.mxu0 0.0
    %238 = vmatpush1.msra.mxu0 0.0
    %239 = vmatprep.subr.mxu0 0.0
    %240 = vmatpush1.msra.mxu0 0.0
    %241 = vmatprep.subr.mxu0 0.0
    %242 = vmatpush1.msra.mxu0 0.0
    %243 = vmatprep.subr.mxu0 0.0
    %244 = vmatpush1.msra.mxu0 0.0
    %245 = vmatprep.subr.mxu0 0.0
    %246 = vmatpush1.msra.mxu0 0.0
    %247 = vmatprep.subr.mxu0 0.0
    %248 = vmatpush1.msra.mxu0 0.0
    %249 = vmatprep.subr.mxu0 0.0
    %250 = vmatpush1.msra.mxu0 0.0
    %251 = vmatprep.subr.mxu0 0.0
    %252 = vmatpush1.msra.mxu0 0.0
    %253 = vmatprep.subr.mxu0 0.0
    %254 = vmatpush1.msra.mxu0 0.0
    %255 = vmatprep.subr.mxu0 0.0
    %256 = vmatpush1.msra.mxu0 0.0
    %257 = vmatprep.mubr.f32.mxu0 0.0
    %258 = vmatmul.mubr.f32.gmra.mrb[0].mxu0 %v146
    %v259 = vpop.f32.mrb[0].mxu0
    %v260 = vadd.f32 %v67, %v259
    %v261 = vpop.f32.mrb[0].mxu0
    %262 = vmatprep.mubr.f32.mxu0 0.0
    %263 = vmatmul.mubr.f32.gmra.mrb[0].mxu0 %v149
    %v264 = vpop.f32.mrb[0].mxu0
    %v265 = vadd.f32 %v72, %v264
    %v266 = vpop.f32.mrb[0].mxu0
    %267 = vmatprep.mubr.f32.mxu0 0.0
    %268 = vmatmul.mubr.f32.gmra.mrb[0].mxu0 %v152
    %v269 = vpop.f32.mrb[0].mxu0
    %v270 = vadd.f32 %v77, %v269
    %v271 = vpop.f32.mrb[0].mxu0
    %272 = vmatprep.mubr.f32.mxu0 0.0
    %273 = vmatmul.mubr.f32.gmra.mrb[0].mxu0 %v155
    %v274 = vpop.f32.mrb[0].mxu0
    %v275 = vadd.f32 %v82, %v274
    %v276 = vpop.f32.mrb[0].mxu0
    %277 = vmatprep.mubr.f32.mxu0 0.0
    %278 = vmatmul.mubr.f32.gmra.mrb[0].mxu0 %v158
    %v279 = vpop.f32.mrb[0].mxu0
    %v280 = vadd.f32 %v87, %v279
    %v281 = vpop.f32.mrb[0].mxu0
    %282 = vmatprep.mubr.f32.mxu0 0.0
    %283 = vmatmul.mubr.f32.gmra.mrb[0].mxu0 %v161
    %v284 = vpop.f32.mrb[0].mxu0
    %v285 = vadd.f32 %v92, %v284
    %v286 = vpop.f32.mrb[0].mxu0
    %287 = vmatprep.mubr.f32.mxu0 0.0
    %288 = vmatmul.mubr.f32.gmra.mrb[0].mxu0 %v164
    %v289 = vpop.f32.mrb[0].mxu0
    %v290 = vadd.f32 %v97, %v289
    %v291 = vpop.f32.mrb[0].mxu0
    %292 = vmatprep.mubr.f32.mxu0 0.0
    %293 = vmatmul.mubr.f32.gmra.mrb[0].mxu0 %v167
    %v294 = vpop.f32.mrb[0].mxu0
    %v295 = vadd.f32 %v102, %v294
    %v296 = vpop.f32.mrb[0].mxu0
    %297 = vmatprep.mubr.f32.mxu0 0.0
    %298 = vmatmul.mubr.f32.gmra.mrb[0].mxu0 %v170
    %v299 = vpop.f32.mrb[0].mxu0
    %v300 = vadd.f32 %v107, %v299
    %v301 = vpop.f32.mrb[0].mxu0
    %302 = vmatprep.mubr.f32.mxu0 0.0
    %303 = vmatmul.mubr.f32.gmra.mrb[0].mxu0 %v173
    %v304 = vpop.f32.mrb[0].mxu0
    %v305 = vadd.f32 %v112, %v304
    %v306 = vpop.f32.mrb[0].mxu0
    %307 = vmatprep.mubr.f32.mxu0 0.0
    %308 = vmatmul.mubr.f32.gmra.mrb[0].mxu0 %v176
    %v309 = vpop.f32.mrb[0].mxu0
    %v310 = vadd.f32 %v117, %v309
    %v311 = vpop.f32.mrb[0].mxu0
    %312 = vmatprep.mubr.f32.mxu0 0.0
    %313 = vmatmul.mubr.f32.gmra.mrb[0].mxu0 %v179
    %v314 = vpop.f32.mrb[0].mxu0
    %v315 = vadd.f32 %v122, %v314
    %v316 = vpop.f32.mrb[0].mxu0
    %317 = vmatprep.mubr.f32.mxu0 0.0
    %318 = vmatmul.mubr.f32.gmra.mrb[0].mxu0 %v182
    %v319 = vpop.f32.mrb[0].mxu0
    %v320 = vadd.f32 %v127, %v319
    %v321 = vpop.f32.mrb[0].mxu0
    %322 = vmatprep.mubr.f32.mxu0 0.0
    %323 = vmatmul.mubr.f32.gmra.mrb[0].mxu0 %v185
    %v324 = vpop.f32.mrb[0].mxu0
    %v325 = vadd.f32 %v132, %v324
    %v326 = vpop.f32.mrb[0].mxu0
    %327 = vmatprep.mubr.f32.mxu0 0.0
    %328 = vmatmul.mubr.f32.gmra.mrb[0].mxu0 %v188
    %v329 = vpop.f32.mrb[0].mxu0
    %v330 = vadd.f32 %v137, %v329
    %v331 = vpop.f32.mrb[0].mxu0
    %332 = vmatprep.mubr.f32.mxu0 0.0
    %333 = vmatmul.mubr.f32.gmra.mrb[0].mxu0 %v191
    %v334 = vpop.f32.mrb[0].mxu0
    %v335 = vadd.f32 %v142, %v334
    %v336 = vpop.f32.mrb[0].mxu0
    %337 = vdwg.mxu0
    %v338 = vtanh.pop %v260
    %v339 = vtanh.pop %v265
    %v340 = vtanh.pop %v270
    %v341 = vtanh.pop %v275
    %v342 = vtanh.pop %v280
    %v343 = vtanh.pop %v285
    %v344 = vtanh.pop %v290
    %v345 = vtanh.pop %v295
    %v346 = vtanh.pop %v300
    %v347 = vtanh.pop %v305
    %v348 = vtanh.pop %v310
    %v349 = vtanh.pop %v315
    %v350 = vtanh.pop %v320
    %v351 = vtanh.pop %v325
    %v352 = vtanh.pop %v330
    %v353 = vtanh.pop %v335
    %v354 = vld [vmem:[%s3] sm:$0xff]
    %v355 = vld [vmem:[%s3 + $0x8] sm:$0xff]
    %v356 = vld [vmem:[%s3 + $0x10] sm:$0xff]
    %v357 = vld [vmem:[%s3 + $0x18] sm:$0xff]
    %v358 = vld [vmem:[%s3 + $0x20] sm:$0xff]
    %v359 = vld [vmem:[%s3 + $0x28] sm:$0xff]
    %v360 = vld [vmem:[%s3 + $0x30] sm:$0xff]
    %v361 = vld [vmem:[%s3 + $0x38] sm:$0xff]
    %v362 = vld [vmem:[%s3 + $0x40] sm:$0xff]
    %v363 = vld [vmem:[%s3 + $0x48] sm:$0xff]
    %v364 = vld [vmem:[%s3 + $0x50] sm:$0xff]
    %v365 = vld [vmem:[%s3 + $0x58] sm:$0xff]
    %v366 = vld [vmem:[%s3 + $0x60] sm:$0xff]
    %v367 = vld [vmem:[%s3 + $0x68] sm:$0xff]
    %v368 = vld [vmem:[%s3 + $0x70] sm:$0xff]
    %v369 = vld [vmem:[%s3 + $0x78] sm:$0xff]
    %v370 = vld [vmem:[%s4] sm:$0xff]
    %v371 = vld [vmem:[%s4 + $0x8] sm:$0xff]
    %v372 = vld [vmem:[%s4 + $0x10] sm:$0xff]
    %v373 = vld [vmem:[%s4 + $0x18] sm:$0xff]
    %v374 = vld [vmem:[%s4 + $0x20] sm:$0xff]
    %v375 = vld [vmem:[%s4 + $0x28] sm:$0xff]
    %v376 = vld [vmem:[%s4 + $0x30] sm:$0xff]
    %v377 = vld [vmem:[%s4 + $0x38] sm:$0xff]
    %v378 = vld [vmem:[%s4 + $0x40] sm:$0xff]
    %v379 = vld [vmem:[%s4 + $0x48] sm:$0xff]
    %v380 = vld [vmem:[%s4 + $0x50] sm:$0xff]
    %v381 = vld [vmem:[%s4 + $0x58] sm:$0xff]
    %v382 = vld [vmem:[%s4 + $0x60] sm:$0xff]
    %v383 = vld [vmem:[%s4 + $0x68] sm:$0xff]
    %v384 = vld [vmem:[%s4 + $0x70] sm:$0xff]
    %v385 = vld [vmem:[%s4 + $0x78] sm:$0xff]
    %387 = vset.pattern.permute.xlu0 0
    %388 = vperm.xlu0 %387, %v370
    %v389 = vpop.permute.xlu0 %388
    %392 = vset.pattern.permute.xlu0 0
    %393 = vperm.xlu0 %392, %v371
    %v394 = vpop.permute.xlu0 %393
    %397 = vset.pattern.permute.xlu0 0
    %398 = vperm.xlu0 %397, %v372
    %v399 = vpop.permute.xlu0 %398
    %402 = vset.pattern.permute.xlu0 0
    %403 = vperm.xlu0 %402, %v373
    %v404 = vpop.permute.xlu0 %403
    %407 = vset.pattern.permute.xlu0 0
    %408 = vperm.xlu0 %407, %v374
    %v409 = vpop.permute.xlu0 %408
    %412 = vset.pattern.permute.xlu0 0
    %413 = vperm.xlu0 %412, %v375
    %v414 = vpop.permute.xlu0 %413
    %417 = vset.pattern.permute.xlu0 0
    %418 = vperm.xlu0 %417, %v376
    %v419 = vpop.permute.xlu0 %418
    %422 = vset.pattern.permute.xlu0 0
    %423 = vperm.xlu0 %422, %v377
    %v424 = vpop.permute.xlu0 %423
    %427 = vset.pattern.permute.xlu0 0
    %428 = vperm.xlu0 %427, %v378
    %v429 = vpop.permute.xlu0 %428
    %432 = vset.pattern.permute.xlu0 0
    %433 = vperm.xlu0 %432, %v379
    %v434 = vpop.permute.xlu0 %433
    %437 = vset.pattern.permute.xlu0 0
    %438 = vperm.xlu0 %437, %v380
    %v439 = vpop.permute.xlu0 %438
    %442 = vset.pattern.permute.xlu0 0
    %443 = vperm.xlu0 %442, %v381
    %v444 = vpop.permute.xlu0 %443
    %447 = vset.pattern.permute.xlu0 0
    %448 = vperm.xlu0 %447, %v382
    %v449 = vpop.permute.xlu0 %448
    %452 = vset.pattern.permute.xlu0 0
    %453 = vperm.xlu0 %452, %v383
    %v454 = vpop.permute.xlu0 %453
    %457 = vset.pattern.permute.xlu0 0
    %458 = vperm.xlu0 %457, %v384
    %v459 = vpop.permute.xlu0 %458
    %462 = vset.pattern.permute.xlu0 0
    %463 = vperm.xlu0 %462, %v385
    %v464 = vpop.permute.xlu0 %463
    %466 = vmatprep.subr.mxu0 0.0
    %467 = vmatpush1.msra.mxu0 %v338
    %468 = vmatprep.subr.mxu0 0.0
    %469 = vmatpush1.msra.mxu0 %v339
    %470 = vmatprep.subr.mxu0 0.0
    %471 = vmatpush1.msra.mxu0 %v340
    %472 = vmatprep.subr.mxu0 0.0
    %473 = vmatpush1.msra.mxu0 %v341
    %474 = vmatprep.subr.mxu0 0.0
    %475 = vmatpush1.msra.mxu0 %v342
    %476 = vmatprep.subr.mxu0 0.0
    %477 = vmatpush1.msra.mxu0 %v343
    %478 = vmatprep.subr.mxu0 0.0
    %479 = vmatpush1.msra.mxu0 %v344
    %480 = vmatprep.subr.mxu0 0.0
    %481 = vmatpush1.msra.mxu0 %v345
    %482 = vmatprep.subr.mxu0 0.0
    %483 = vmatpush1.msra.mxu0 %v346
    %484 = vmatprep.subr.mxu0 0.0
    %485 = vmatpush1.msra.mxu0 %v347
    %486 = vmatprep.subr.mxu0 0.0
    %487 = vmatpush1.msra.mxu0 %v348
    %488 = vmatprep.subr.mxu0 0.0
    %489 = vmatpush1.msra.mxu0 %v349
    %490 = vmatprep.subr.mxu0 0.0
    %491 = vmatpush1.msra.mxu0 %v350
    %492 = vmatprep.subr.mxu0 0.0
    %493 = vmatpush1.msra.mxu0 %v351
    %494 = vmatprep.subr.mxu0 0.0
    %495 = vmatpush1.msra.mxu0 %v352
    %496 = vmatprep.subr.mxu0 0.0
    %497 = vmatpush1.msra.mxu0 %v353
    %498 = vmatprep.subr.mxu0 0.0
    %499 = vmatpush1.msra.mxu0 0.0
    %500 = vmatprep.subr.mxu0 0.0
    %501 = vmatpush1.msra.mxu0 0.0
    %502 = vmatprep.subr.mxu0 0.0
    %503 = vmatpush1.msra.mxu0 0.0
    %504 = vmatprep.subr.mxu0 0.0
    %505 = vmatpush1.msra.mxu0 0.0
    %506 = vmatprep.subr.mxu0 0.0
    %507 = vmatpush1.msra.mxu0 0.0
    %508 = vmatprep.subr.mxu0 0.0
    %509 = vmatpush1.msra.mxu0 0.0
    %510 = vmatprep.subr.mxu0 0.0
    %511 = vmatpush1.msra.mxu0 0.0
    %512 = vmatprep.subr.mxu0 0.0
    %513 = vmatpush1.msra.mxu0 0.0
    %514 = vmatprep.subr.mxu0 0.0
    %515 = vmatpush1.msra.mxu0 0.0
    %516 = vmatprep.subr.mxu0 0.0
    %517 = vmatpush1.msra.mxu0 0.0
    %518 = vmatprep.subr.mxu0 0.0
    %519 = vmatpush1.msra.mxu0 0.0
    %520 = vmatprep.subr.mxu0 0.0
    %521 = vmatpush1.msra.mxu0 0.0
    %522 = vmatprep.subr.mxu0 0.0
    %523 = vmatpush1.msra.mxu0 0.0
    %524 = vmatprep.subr.mxu0 0.0
    %525 = vmatpush1.msra.mxu0 0.0
    %526 = vmatprep.subr.mxu0 0.0
    %527 = vmatpush1.msra.mxu0 0.0
    %528 = vmatprep.subr.mxu0 0.0
    %529 = vmatpush1.msra.mxu0 0.0
    %530 = vmatprep.mubr.f32.mxu0 0.0
    %531 = vmatmul.mubr.f32.gmra.mrb[0].mxu0 %v354
    %v532 = vpop.f32.mrb[0].mxu0
    %v533 = vadd.f32 %v389, %v532
    %v534 = vpop.f32.mrb[0].mxu0
    %535 = vmatprep.mubr.f32.mxu0 0.0
    %536 = vmatmul.mubr.f32.gmra.mrb[0].mxu0 %v355
    %v537 = vpop.f32.mrb[0].mxu0
    %v538 = vadd.f32 %v394, %v537
    %v539 = vpop.f32.mrb[0].mxu0
    %540 = vmatprep.mubr.f32.mxu0 0.0
    %541 = vmatmul.mubr.f32.gmra.mrb[0].mxu0 %v356
    %v542 = vpop.f32.mrb[0].mxu0
    %v543 = vadd.f32 %v399, %v542
    %v544 = vpop.f32.mrb[0].mxu0
    %545 = vmatprep.mubr.f32.mxu0 0.0
    %546 = vmatmul.mubr.f32.gmra.mrb[0].mxu0 %v357
    %v547 = vpop.f32.mrb[0].mxu0
    %v548 = vadd.f32 %v404, %v547
    %v549 = vpop.f32.mrb[0].mxu0
    %550 = vmatprep.mubr.f32.mxu0 0.0
    %551 = vmatmul.mubr.f32.gmra.mrb[0].mxu0 %v358
    %v552 = vpop.f32.mrb[0].mxu0
    %v553 = vadd.f32 %v409, %v552
    %v554 = vpop.f32.mrb[0].mxu0
    %555 = vmatprep.mubr.f32.mxu0 0.0
    %556 = vmatmul.mubr.f32.gmra.mrb[0].mxu0 %v359
    %v557 = vpop.f32.mrb[0].mxu0
    %v558 = vadd.f32 %v414, %v557
    %v559 = vpop.f32.mrb[0].mxu0
    %560 = vmatprep.mubr.f32.mxu0 0.0
    %561 = vmatmul.mubr.f32.gmra.mrb[0].mxu0 %v360
    %v562 = vpop.f32.mrb[0].mxu0
    %v563 = vadd.f32 %v419, %v562
    %v564 = vpop.f32.mrb[0].mxu0
    %565 = vmatprep.mubr.f32.mxu0 0.0
    %566 = vmatmul.mubr.f32.gmra.mrb[0].mxu0 %v361
    %v567 = vpop.f32.mrb[0].mxu0
    %v568 = vadd.f32 %v424, %v567
    %v569 = vpop.f32.mrb[0].mxu0
    %570 = vmatprep.mubr.f32.mxu0 0.0
    %571 = vmatmul.mubr.f32.gmra.mrb[0].mxu0 %v362
    %v572 = vpop.f32.mrb[0].mxu0
    %v573 = vadd.f32 %v429, %v572
    %v574 = vpop.f32.mrb[0].mxu0
    %575 = vmatprep.mubr.f32.mxu0 0.0
    %576 = vmatmul.mubr.f32.gmra.mrb[0].mxu0 %v363
    %v577 = vpop.f32.mrb[0].mxu0
    %v578 = vadd.f32 %v434, %v577
    %v579 = vpop.f32.mrb[0].mxu0
    %580 = vmatprep.mubr.f32.mxu0 0.0
    %581 = vmatmul.mubr.f32.gmra.mrb[0].mxu0 %v364
    %v582 = vpop.f32.mrb[0].mxu0
    %v583 = vadd.f32 %v439, %v582
    %v584 = vpop.f32.mrb[0].mxu0
    %585 = vmatprep.mubr.f32.mxu0 0.0
    %586 = vmatmul.mubr.f32.gmra.mrb[0].mxu0 %v365
    %v587 = vpop.f32.mrb[0].mxu0
    %v588 = vadd.f32 %v444, %v587
    %v589 = vpop.f32.mrb[0].mxu0
    %590 = vmatprep.mubr.f32.mxu0 0.0
    %591 = vmatmul.mubr.f32.gmra.mrb[0].mxu0 %v366
    %v592 = vpop.f32.mrb[0].mxu0
    %v593 = vadd.f32 %v449, %v592
    %v594 = vpop.f32.mrb[0].mxu0
    %595 = vmatprep.mubr.f32.mxu0 0.0
    %596 = vmatmul.mubr.f32.gmra.mrb[0].mxu0 %v367
    %v597 = vpop.f32.mrb[0].mxu0
    %v598 = vadd.f32 %v454, %v597
    %v599 = vpop.f32.mrb[0].mxu0
    %600 = vmatprep.mubr.f32.mxu0 0.0
    %601 = vmatmul.mubr.f32.gmra.mrb[0].mxu0 %v368
    %v602 = vpop.f32.mrb[0].mxu0
    %v603 = vadd.f32 %v459, %v602
    %v604 = vpop.f32.mrb[0].mxu0
    %605 = vmatprep.mubr.f32.mxu0 0.0
    %606 = vmatmul.mubr.f32.gmra.mrb[0].mxu0 %v369
    %v607 = vpop.f32.mrb[0].mxu0
    %v608 = vadd.f32 %v464, %v607
    %v609 = vpop.f32.mrb[0].mxu0
    %610 = vdwg.mxu0
    %v611 = vtanh.pop %v533
    %v612 = vtanh.pop %v538
    %v613 = vtanh.pop %v543
    %v614 = vtanh.pop %v548
    %v615 = vtanh.pop %v553
    %v616 = vtanh.pop %v558
    %v617 = vtanh.pop %v563
    %v618 = vtanh.pop %v568
    %v619 = vtanh.pop %v573
    %v620 = vtanh.pop %v578
    %v621 = vtanh.pop %v583
    %v622 = vtanh.pop %v588
    %v623 = vtanh.pop %v593
    %v624 = vtanh.pop %v598
    %v625 = vtanh.pop %v603
    %v626 = vtanh.pop %v608
    %v627 = vld [vmem:[%s5] sm:$0xff]
    %v628 = vld [vmem:[%s5 + $0x8] sm:$0xff]
    %v629 = vld [vmem:[%s5 + $0x10] sm:$0xff]
    %v630 = vld [vmem:[%s5 + $0x18] sm:$0xff]
    %v631 = vld [vmem:[%s5 + $0x20] sm:$0xff]
    %v632 = vld [vmem:[%s5 + $0x28] sm:$0xff]
    %v633 = vld [vmem:[%s5 + $0x30] sm:$0xff]
    %v634 = vld [vmem:[%s5 + $0x38] sm:$0xff]
    %v635 = vld [vmem:[%s5 + $0x40] sm:$0xff]
    %v636 = vld [vmem:[%s5 + $0x48] sm:$0xff]
    %v637 = vld [vmem:[%s5 + $0x50] sm:$0xff]
    %v638 = vld [vmem:[%s5 + $0x58] sm:$0xff]
    %v639 = vld [vmem:[%s5 + $0x60] sm:$0xff]
    %v640 = vld [vmem:[%s5 + $0x68] sm:$0xff]
    %v641 = vld [vmem:[%s5 + $0x70] sm:$0xff]
    %v642 = vld [vmem:[%s5 + $0x78] sm:$0xff]
    %644 = vset.pattern.permute.xlu0 0
    %645 = vperm.xlu0 %644, %v627
    %v646 = vpop.permute.xlu0 %645
    %649 = vset.pattern.permute.xlu0 0
    %650 = vperm.xlu0 %649, %v628
    %v651 = vpop.permute.xlu0 %650
    %654 = vset.pattern.permute.xlu0 0
    %655 = vperm.xlu0 %654, %v629
    %v656 = vpop.permute.xlu0 %655
    %659 = vset.pattern.permute.xlu0 0
    %660 = vperm.xlu0 %659, %v630
    %v661 = vpop.permute.xlu0 %660
    %664 = vset.pattern.permute.xlu0 0
    %665 = vperm.xlu0 %664, %v631
    %v666 = vpop.permute.xlu0 %665
    %669 = vset.pattern.permute.xlu0 0
    %670 = vperm.xlu0 %669, %v632
    %v671 = vpop.permute.xlu0 %670
    %674 = vset.pattern.permute.xlu0 0
    %675 = vperm.xlu0 %674, %v633
    %v676 = vpop.permute.xlu0 %675
    %679 = vset.pattern.permute.xlu0 0
    %680 = vperm.xlu0 %679, %v634
    %v681 = vpop.permute.xlu0 %680
    %684 = vset.pattern.permute.xlu0 0
    %685 = vperm.xlu0 %684, %v635
    %v686 = vpop.permute.xlu0 %685
    %689 = vset.pattern.permute.xlu0 0
    %690 = vperm.xlu0 %689, %v636
    %v691 = vpop.permute.xlu0 %690
    %694 = vset.pattern.permute.xlu0 0
    %695 = vperm.xlu0 %694, %v637
    %v696 = vpop.permute.xlu0 %695
    %699 = vset.pattern.permute.xlu0 0
    %700 = vperm.xlu0 %699, %v638
    %v701 = vpop.permute.xlu0 %700
    %704 = vset.pattern.permute.xlu0 0
    %705 = vperm.xlu0 %704, %v639
    %v706 = vpop.permute.xlu0 %705
    %709 = vset.pattern.permute.xlu0 0
    %710 = vperm.xlu0 %709, %v640
    %v711 = vpop.permute.xlu0 %710
    %714 = vset.pattern.permute.xlu0 0
    %715 = vperm.xlu0 %714, %v641
    %v716 = vpop.permute.xlu0 %715
    %719 = vset.pattern.permute.xlu0 0
    %720 = vperm.xlu0 %719, %v642
    %v721 = vpop.permute.xlu0 %720
    %v723 = vmul.f32 %v611, %v646
    %v724 = vmul.f32 %v612, %v651
    %v725 = vmul.f32 %v613, %v656
    %v726 = vmul.f32 %v614, %v661
    %v727 = vmul.f32 %v615, %v666
    %v728 = vmul.f32 %v616, %v671
    %v729 = vmul.f32 %v617, %v676
    %v730 = vmul.f32 %v618, %v681
    %v731 = vmul.f32 %v619, %v686
    %v732 = vmul.f32 %v620, %v691
    %v733 = vmul.f32 %v621, %v696
    %v734 = vmul.f32 %v622, %v701
    %v735 = vmul.f32 %v623, %v706
    %v736 = vmul.f32 %v624, %v711
    %v737 = vmul.f32 %v625, %v716
    %v738 = vmul.f32 %v626, %v721
    %v739 = vadd.f32 %v723, %v724
    %v740 = vadd.f32 %v739, %v725
    %v741 = vadd.f32 %v740, %v726
    %v742 = vadd.f32 %v741, %v727
    %v743 = vadd.f32 %v742, %v728
    %v744 = vadd.f32 %v743, %v729
    %v745 = vadd.f32 %v744, %v730
    %v746 = vadd.f32 %v745, %v731
    %v747 = vadd.f32 %v746, %v732
    %v748 = vadd.f32 %v747, %v733
    %v749 = vadd.f32 %v748, %v734
    %v750 = vadd.f32 %v749, %v735
    %v751 = vadd.f32 %v750, %v736
    %v752 = vadd.f32 %v751, %v737
    %v753 = vadd.f32 %v752, %v738
    %v754 = vrot.slane %v753, 4
    %v755 = vadd.f32 %v753, %v754
    %v756 = vrot.slane %v755, 2
    %v757 = vadd.f32 %v755, %v756
    %v758 = vrot.slane %v757, 1
    %v759 = vadd.f32 %v757, %v758
    %s760 = sld [smem:[#allocation2]]
    %v761 = vstv %s760
    %v762 = vadd.f32 %v759, %v761
    %763 = vst [vmem:[#allocation3] sm:$0x1] %v762
    // Predicated region
    $region30: #{tpu_custom_call.1} parent=1 // pred_check
      _
    $region31: #{tpu_custom_call.1} parent=1 // pred_check_branch
      %765 = sbr.rel (0) target = $region33
    $region32: #{tpu_custom_call.1} parent=1 // pred_region
      %s767 = ssub.s32 16, 16
      %768 = vsyncadd [#allocation4], %s767
      %s770 = sshll.u32 [#allocation3], 4
      %s771 = int_to_ptr.vmem [resolvable:$true] %s770
      %773 = dma.vmem_to_hbm [thread:$0]  %s771, 16, %s7, [#allocation4]
    $region33: #{tpu_custom_call.1} parent=1 // pred_fallthru
      _
    // Predicated region
    $region34: #{tpu_custom_call.1} parent=1 // pred_check
      _
    $region35: #{tpu_custom_call.1} parent=1 // pred_check_branch
      %775 = sbr.rel (0) target = $region37
    $region36: #{tpu_custom_call.1} parent=1 // pred_region
      %776 = dma.done [#allocation4], 16
    $region37: #{tpu_custom_call.1} parent=1 // pred_fallthru
      _
    %777 = vsyncpa [#allocation4], 1

</llo_original>
